<compile_context>
chip_gen: v5e
topology: v5e:2x2
jax: 0.10.0
libtpu: 0.0.40
codegen_flags: <defaults>
</compile_context>

<pallas_src>
import jax
import jax.numpy as jnp
from jax.experimental import pallas as pl
from jax.experimental.pallas import tpu as pltpu

EPS = 1e-5          # nn.LayerNorm default
LEAKY_SLOPE = 0.2   # nn.LeakyReLU(0.2)


def _round_up(n, m):
    return ((n + m - 1) // m) * m


def _choose_batch_tile(B, cap=512):
    """Batch tile (multiple of 16) aiming for ~8 grid steps, >=64 rows per step."""
    tb = _round_up(pl.cdiv(B, 8), 16)     # ~8 steps if the batch is big enough
    tb = max(64, min(tb, cap))            # keep each DMA reasonably large
    tb = min(tb, _round_up(B, 16))        # never bigger than one (rounded) batch
    return tb


def _resident_spec(shape):
    """BlockSpec for a block that never changes across the grid: single-buffered."""
    zeros = (0,) * len(shape)
    index_map = lambda i, _z=zeros: _z
    try:
        return pl.BlockSpec(shape, index_map, pipeline_mode=pl.Buffered(1))
    except TypeError:
        # TODO(synk): pipeline_mode unavailable in this JAX version; fall back to
        # default double-buffering (only costs extra VMEM for the resident weights).
        return pl.BlockSpec(shape, index_map)


def _ked_kernel(x_ref, w1_ref, vec_ref, w2_ref, b2_ref, o_ref):
    # First GEMM on the MXU: x @ (W1[:E] + W1[E:]) + b1   (folded kb=None concat).
    x_bf = x_ref[...].astype(jnp.bfloat16)                       # [TB, E] bf16
    h = (jnp.dot(x_bf, w1_ref[...], preferred_element_type=jnp.float32)
         + vec_ref[0:1, :])                                      # [TB, H] f32

    # LayerNorm, single-pass stats (biased variance, matches PyTorch), f32.
    mu = jnp.mean(h, axis=-1, keepdims=True)
    ms = jnp.mean(h * h, axis=-1, keepdims=True)
    var = jnp.maximum(ms - mu * mu, 0.0)
    hn = (h - mu) * jax.lax.rsqrt(var + EPS) * vec_ref[1:2, :] + vec_ref[2:3, :]

    # LeakyReLU(0.2); Dropout(0.1) is identity at inference.
    act = jnp.where(hn > 0, hn, LEAKY_SLOPE * hn)

    # Second GEMM on the MXU, bf16 inputs / f32 accumulation.
    out = jnp.dot(act.astype(jnp.bfloat16), w2_ref[...],
                  preferred_element_type=jnp.float32)            # [TB, E] f32

    # Residual + fused output bias -> single store. Re-read x_ref (already in VMEM)
    # so the f32 x tile isn't held live across the whole body.
    o_ref[...] = (x_ref[...] + out + b2_ref[...]).astype(o_ref.dtype)


def knowledge_enhanced_decoder_fwd(x, kparams, *, block_cap=512, out_dtype=jnp.float32):
    """x: [B, E] float32. Batch-tiled Pallas kernel with resident bf16 weights."""
    B, E = x.shape
    w1 = kparams["w1_eff"]   # [E, H] bf16 (fold done in f32; valid because enhanced == x)
    w2 = kparams["w2"]       # [H, E] bf16
    vec = kparams["vec"]     # [3, H] f32: rows = b1, gamma, beta
    b2 = kparams["b2"]       # [1, E] f32
    H = w1.shape[1]

    tb = _choose_batch_tile(B, block_cap)
    grid = (pl.cdiv(B, tb),)   # partial last block handled by Pallas output masking

    # Explicit VMEM budget: resident weights (single-buffered) + streamed f32 tiles
    # (double-buffered) + headroom for the [tb, H] f32 intermediates.
    vmem_bytes = (
        (E * H + H * E) * 2            # bf16 weights, single buffer each
        + (3 * H + E) * 4 * 2          # small resident vectors
        + 2 * (tb * E * 4) * 2         # x in / out streams, 2 buffers each
        + 8 * (tb * H * 4)             # f32 intermediates (h, hn, act, ...)
    )
    vmem_limit = int(min(max(2 * vmem_bytes, 4 << 20), 32 << 20))

    cost = pl.CostEstimate(
        flops=2 * B * (E * H + H * E),
        transcendentals=B,                               # one rsqrt per row
        bytes_accessed=2 * B * E * 4 + (E * H + H * E) * 2 + (3 * H + E) * 4,
    )

    out = pl.pallas_call(
        _ked_kernel,
        out_shape=jax.ShapeDtypeStruct((B, E), out_dtype),
        grid_spec=pltpu.PrefetchScalarGridSpec(
            num_scalar_prefetch=0,
            grid=grid,
            in_specs=[
                pl.BlockSpec((tb, E), lambda i: (i, 0)),   # x tile (pipelined stream)
                _resident_spec((E, H)),                    # W1_eff (resident, 1 buffer)
                _resident_spec((3, H)),                    # packed b1 / gamma / beta
                _resident_spec((H, E)),                    # W2 (resident, 1 buffer)
                _resident_spec((1, E)),                    # b2
            ],
            out_specs=pl.BlockSpec((tb, E), lambda i: (i, 0)),
        ),
        compiler_params=pltpu.CompilerParams(
            dimension_semantics=("parallel",),
            vmem_limit_bytes=vmem_limit,
        ),
        cost_estimate=cost,
    )(x, w1, vec, w2, b2)

    return out


def init_params(key, embedding_dim, hidden_dim):
    """Deterministic synthetic parameter init (PyTorch-Linear-style uniform), f32."""
    ks = jax.random.split(key, 4)
    E, H = embedding_dim, hidden_dim
    lim1 = 1.0 / jnp.sqrt(2.0 * E)
    lim2 = 1.0 / jnp.sqrt(1.0 * H)
    # W1 of nn.Linear(2E, H) has torch shape [H, 2E]; stored transposed as [2E, H].
    w1 = jax.random.uniform(ks[0], (2 * E, H), jnp.float32, -lim1, lim1)
    b1 = jax.random.uniform(ks[1], (1, H), jnp.float32, -lim1, lim1)
    # W2 of nn.Linear(H, E): stored transposed as [H, E].
    w2 = jax.random.uniform(ks[2], (H, E), jnp.float32, -lim2, lim2)
    b2 = jax.random.uniform(ks[3], (1, E), jnp.float32, -lim2, lim2)
    gamma = jnp.ones((1, H), jnp.float32)
    beta = jnp.zeros((1, H), jnp.float32)
    return {"w1": w1, "b1": b1, "gamma": gamma, "beta": beta, "w2": w2, "b2": b2}


def prepare_kernel_params(params, embedding_dim):
    """Fold W1 for the kb=None (enhanced == x) path, pack small vectors, pre-cast GEMM weights."""
    E = embedding_dim
    w1 = params["w1"]
    w1_eff = (w1[:E, :] + w1[E:, :]).astype(jnp.bfloat16)          # fold in f32, cast after
    vec = jnp.concatenate([params["b1"], params["gamma"], params["beta"]], axis=0)  # [3, H]
    return {
        "w1_eff": w1_eff,
        "w2": params["w2"].astype(jnp.bfloat16),
        "vec": vec,
        "b2": params["b2"],
    }


def _reference_fwd(x, params):
    """Plain-JAX f32 reference mirroring the PyTorch forward (eval mode, kb=None)."""
    enhanced = x
    concat = jnp.concatenate([x, enhanced], axis=1)
    h = concat @ params["w1"] + params["b1"]
    mu = jnp.mean(h, axis=-1, keepdims=True)
    var = jnp.mean((h - mu) ** 2, axis=-1, keepdims=True)
    hn = (h - mu) / jnp.sqrt(var + EPS) * params["gamma"] + params["beta"]
    act = jnp.where(hn > 0, hn, LEAKY_SLOPE * hn)
    out = act @ params["w2"] + params["b2"]
    return x + out


if __name__ == "__main__":
    # Lane-aligned feature dims (E, H multiples of 128); batch large enough for a 4-step grid.
    B, E, H = 256, 128, 256

    key = jax.random.PRNGKey(0)
    k_x, k_p = jax.random.split(key)
    x = jax.random.normal(k_x, (B, E), jnp.float32)
    params = init_params(k_p, E, H)
    kparams = prepare_kernel_params(params, E)

    y = knowledge_enhanced_decoder_fwd(x, kparams)
    y = jax.block_until_ready(y)
    y_ref = _reference_fwd(x, params)
    assert y.shape == (B, E)
    # bf16 GEMM inputs -> relaxed tolerance vs the f32 reference.
    assert jnp.allclose(y, y_ref, atol=5e-2, rtol=5e-2), (
        f"mismatch vs JAX reference, max abs err {jnp.max(jnp.abs(y - y_ref))}")

    # Batch that is not a tile multiple: exercises the partial-last-block path (no wrapper pad).
    x2 = jax.random.normal(jax.random.PRNGKey(1), (40, E), jnp.float32)
    y2 = jax.block_until_ready(knowledge_enhanced_decoder_fwd(x2, kparams))
    y2_ref = _reference_fwd(x2, params)
    assert y2.shape == (40, E)
    assert jnp.allclose(y2, y2_ref, atol=5e-2, rtol=5e-2), "mismatch on partial-block path"

    print("KERNEL_OK")
</pallas_src>

<mosaic_0001>
module attributes {stable_mosaic.version = 11 : i64} {
  func.func @_ked_kernel(%arg0: i32, %arg1: memref<64x128xf32, #tpu.memory_space<vmem>>, %arg2: memref<128x256xbf16, #tpu.memory_space<vmem>>, %arg3: memref<3x256xf32, #tpu.memory_space<vmem>>, %arg4: memref<256x128xbf16, #tpu.memory_space<vmem>>, %arg5: memref<1x128xf32, #tpu.memory_space<vmem>>, %arg6: memref<64x128xf32, #tpu.memory_space<vmem>>) attributes {dimension_semantics = [#tpu.dimension_semantics<parallel>], iteration_bounds = array<i64: 4>, scalar_prefetch = 0 : i64, scratch_operands = 0 : i64, tpu.core_type = #tpu.core_type<tc>, window_params = [{transform_indices = @transform_0, window_bounds = array<i64: 64, 128>}, {pipeline_mode = #tpu.pipeline_mode<synchronous>, transform_indices = @transform_1, window_bounds = array<i64: 128, 256>}, {pipeline_mode = #tpu.pipeline_mode<synchronous>, transform_indices = @transform_2, window_bounds = array<i64: 3, 256>}, {pipeline_mode = #tpu.pipeline_mode<synchronous>, transform_indices = @transform_3, window_bounds = array<i64: 256, 128>}, {pipeline_mode = #tpu.pipeline_mode<synchronous>, transform_indices = @transform_4, window_bounds = array<i64: 1, 128>}, {transform_indices = @transform_5, window_bounds = array<i64: 64, 128>}]} {
    %c0 = arith.constant 0 : index
    %c0_0 = arith.constant 0 : index
    %0 = vector.load %arg1[%c0, %c0_0] : memref<64x128xf32, #tpu.memory_space<vmem>>, vector<64x128xf32>
    %1 = arith.truncf %0 : vector<64x128xf32> to vector<64x128xbf16>
    %c0_1 = arith.constant 0 : index
    %c0_2 = arith.constant 0 : index
    %2 = vector.load %arg2[%c0_1, %c0_2] : memref<128x256xbf16, #tpu.memory_space<vmem>>, vector<128x256xbf16>
    %cst = arith.constant dense<0.000000e+00> : vector<64x256xf32>
    %3 = tpu.matmul %1, %2, %cst {dimension_numbers = #tpu.dot_dimension_numbers<[1], [0], [0], [1], [0, 0, 1, 1], [], []>} : vector<64x128xbf16>, vector<128x256xbf16>, vector<64x256xf32> -> vector<64x256xf32>
    %c0_3 = arith.constant 0 : index
    %c0_4 = arith.constant 0 : index
    %4 = vector.load %arg3[%c0_3, %c0_4] : memref<3x256xf32, #tpu.memory_space<vmem>>, vector<1x256xf32>
    %5 = vector.broadcast %4 : vector<1x256xf32> to vector<64x256xf32>
    %6 = arith.addf %3, %5 : vector<64x256xf32>
    %cst_5 = arith.constant dense<0.000000e+00> : vector<64xf32>
    %7 = vector.multi_reduction <add>, %6, %cst_5 [1] : vector<64x256xf32> to vector<64xf32>
    %8 = vector.shape_cast %7 : vector<64xf32> to vector<64x1xf32>
    %cst_6 = arith.constant 2.560000e+02 : f32
    %9 = vector.broadcast %cst_6 : f32 to vector<64x1xf32>
    %10 = arith.divf %8, %9 : vector<64x1xf32>
    %11 = arith.mulf %6, %6 : vector<64x256xf32>
    %cst_7 = arith.constant dense<0.000000e+00> : vector<64xf32>
    %12 = vector.multi_reduction <add>, %11, %cst_7 [1] : vector<64x256xf32> to vector<64xf32>
    %13 = vector.shape_cast %12 : vector<64xf32> to vector<64x1xf32>
    %cst_8 = arith.constant 2.560000e+02 : f32
    %14 = vector.broadcast %cst_8 : f32 to vector<64x1xf32>
    %15 = arith.divf %13, %14 : vector<64x1xf32>
    %16 = arith.mulf %10, %10 : vector<64x1xf32>
    %17 = arith.subf %15, %16 : vector<64x1xf32>
    %cst_9 = arith.constant 0.000000e+00 : f32
    %18 = vector.broadcast %cst_9 : f32 to vector<64x1xf32>
    %19 = arith.maximumf %17, %18 : vector<64x1xf32>
    %20 = vector.broadcast %10 : vector<64x1xf32> to vector<64x256xf32>
    %21 = arith.subf %6, %20 : vector<64x256xf32>
    %cst_10 = arith.constant 9.99999974E-6 : f32
    %22 = vector.broadcast %cst_10 : f32 to vector<64x1xf32>
    %23 = arith.addf %19, %22 : vector<64x1xf32>
    %24 = math.rsqrt %23 : vector<64x1xf32>
    %25 = vector.broadcast %24 : vector<64x1xf32> to vector<64x256xf32>
    %26 = arith.mulf %21, %25 : vector<64x256xf32>
    %c1 = arith.constant 1 : index
    %c0_11 = arith.constant 0 : index
    %27 = vector.load %arg3[%c1, %c0_11] : memref<3x256xf32, #tpu.memory_space<vmem>>, vector<1x256xf32>
    %28 = vector.broadcast %27 : vector<1x256xf32> to vector<64x256xf32>
    %29 = arith.mulf %26, %28 : vector<64x256xf32>
    %c2 = arith.constant 2 : index
    %c0_12 = arith.constant 0 : index
    %30 = vector.load %arg3[%c2, %c0_12] : memref<3x256xf32, #tpu.memory_space<vmem>>, vector<1x256xf32>
    %31 = vector.broadcast %30 : vector<1x256xf32> to vector<64x256xf32>
    %32 = arith.addf %29, %31 : vector<64x256xf32>
    %cst_13 = arith.constant 0.000000e+00 : f32
    %33 = vector.broadcast %cst_13 : f32 to vector<64x256xf32>
    %34 = arith.cmpf ogt, %32, %33 : vector<64x256xf32>
    %cst_14 = arith.constant 2.000000e-01 : f32
    %35 = vector.broadcast %cst_14 : f32 to vector<64x256xf32>
    %36 = arith.mulf %35, %32 : vector<64x256xf32>
    %37 = arith.select %34, %32, %36 : vector<64x256xi1>, vector<64x256xf32>
    %38 = arith.truncf %37 : vector<64x256xf32> to vector<64x256xbf16>
    %c0_15 = arith.constant 0 : index
    %c0_16 = arith.constant 0 : index
    %39 = vector.load %arg4[%c0_15, %c0_16] : memref<256x128xbf16, #tpu.memory_space<vmem>>, vector<256x128xbf16>
    %cst_17 = arith.constant dense<0.000000e+00> : vector<64x128xf32>
    %40 = tpu.matmul %38, %39, %cst_17 {dimension_numbers = #tpu.dot_dimension_numbers<[1], [0], [0], [1], [0, 0, 1, 1], [], []>} : vector<64x256xbf16>, vector<256x128xbf16>, vector<64x128xf32> -> vector<64x128xf32>
    %c0_18 = arith.constant 0 : index
    %c0_19 = arith.constant 0 : index
    %41 = vector.load %arg1[%c0_18, %c0_19] : memref<64x128xf32, #tpu.memory_space<vmem>>, vector<64x128xf32>
    %42 = arith.addf %41, %40 : vector<64x128xf32>
    %c0_20 = arith.constant 0 : index
    %c0_21 = arith.constant 0 : index
    %43 = vector.load %arg5[%c0_20, %c0_21] : memref<1x128xf32, #tpu.memory_space<vmem>>, vector<1x128xf32>
    %44 = vector.broadcast %43 : vector<1x128xf32> to vector<64x128xf32>
    %45 = arith.addf %42, %44 : vector<64x128xf32>
    %c0_22 = arith.constant 0 : index
    %c0_23 = arith.constant 0 : index
    %46 = vector.load %arg6[%c0_22, %c0_23] : memref<64x128xf32, #tpu.memory_space<vmem>>, vector<64x128xf32>
    tpu.vector_store %arg6[%c0_22, %c0_23], %45 {strides = array<i32>} : memref<64x128xf32, #tpu.memory_space<vmem>>, vector<64x128xf32>,
    return
  }
  func.func @transform_0(%arg0: i32) -> (i32, i32) {
    %c0_i32 = arith.constant 0 : i32
    %c0_i32_0 = arith.constant 0 : i32
    return %arg0, %c0_i32 : i32, i32
  }
  func.func @transform_1(%arg0: i32) -> (i32, i32) {
    %c0_i32 = arith.constant 0 : i32
    %c0_i32_0 = arith.constant 0 : i32
    %c0_i32_1 = arith.constant 0 : i32
    return %c0_i32, %c0_i32_0 : i32, i32
  }
  func.func @transform_2(%arg0: i32) -> (i32, i32) {
    %c0_i32 = arith.constant 0 : i32
    %c0_i32_0 = arith.constant 0 : i32
    %c0_i32_1 = arith.constant 0 : i32
    return %c0_i32, %c0_i32_0 : i32, i32
  }
  func.func @transform_3(%arg0: i32) -> (i32, i32) {
    %c0_i32 = arith.constant 0 : i32
    %c0_i32_0 = arith.constant 0 : i32
    %c0_i32_1 = arith.constant 0 : i32
    return %c0_i32, %c0_i32_0 : i32, i32
  }
  func.func @transform_4(%arg0: i32) -> (i32, i32) {
    %c0_i32 = arith.constant 0 : i32
    %c0_i32_0 = arith.constant 0 : i32
    %c0_i32_1 = arith.constant 0 : i32
    return %c0_i32, %c0_i32_0 : i32, i32
  }
  func.func @transform_5(%arg0: i32) -> (i32, i32) {
    %c0_i32 = arith.constant 0 : i32
    %c0_i32_0 = arith.constant 0 : i32
    return %arg0, %c0_i32 : i32, i32
  }
}

</mosaic_0001>

<llo_original>
// kernel: tpu_custom_call.1
$region0: #{tpu_custom_call.1}
  #allocation0 [shape = 'u32[]', space=smem, size = 0x4, offset = 0x4, fixed_abs, tag = 'smem constant byte address 0x4 - core index']
  #allocation1 [shape = 'u32[72,128]{1,0:T(1,128)}', space=vmem, size = 0x9000, scoped, tag = 'internal scratch']
  %s0 = inlined_call_operand.hbm [shape: f32[256,128], index: 0, kind: input, shape index: {}]
  %s1 = inlined_call_operand.hbm [shape: bf16[128,256], index: 1, kind: input, shape index: {}]
  %s2 = inlined_call_operand.hbm [shape: f32[3,256], index: 2, kind: input, shape index: {}]
  %s3 = inlined_call_operand.hbm [shape: bf16[256,128], index: 3, kind: input, shape index: {}]
  %s4 = inlined_call_operand.vmem [shape: f32[1,128], index: 4, kind: input, shape index: {}]
  %s5 = inlined_call_operand.hbm [shape: f32[256,128], index: 5, kind: output, shape index: {}]
  %s6 = sld [smem:[#allocation0]]
  $region69: #{tpu_custom_call.1} parent=0
    _
  %s8 = ssub.s32 1, %s6
  %s9 = scalar_select 0, %s8, %s6
  $region1: #{tpu_custom_call.1} parent=0
    #allocation2 [shape = 'u8[65536]{0}', space=vmem, size = 0x10000, scoped, tag = 'input window, operand 0']
    #allocation3 [shape = 's32[2]{0}', space=sflag, size = 0x8, scoped, tag = 'scoped memory for tpu_custom_call.1']
    #allocation4 [shape = 's32[2]{0}', space=sflag, size = 0x8, scoped, tag = 'scoped memory for tpu_custom_call.1']
    #allocation5 [shape = 'u8[65536]{0}', space=vmem, size = 0x10000, scoped, tag = 'input window, operand 1, single buffered']
    #allocation6 [shape = 's32[1]{0}', space=sflag, size = 0x4, scoped, tag = 'scoped memory for tpu_custom_call.1']
    #allocation7 [shape = 'u8[4096]{0}', space=vmem, size = 0x1000, scoped, tag = 'input window, operand 2, single buffered']
    #allocation8 [shape = 'u8[65536]{0}', space=vmem, size = 0x10000, scoped, tag = 'input window, operand 3, single buffered']
    #allocation9 [shape = 's32[1]{0}', space=sflag, size = 0x4, scoped, tag = 'scoped memory for tpu_custom_call.1']
    #allocation10 [shape = 'u8[65536]{0}', space=vmem, size = 0x10000, scoped, tag = 'output window, operand 0']
    %10 = vsyncpa [#allocation3], 0
    %s11 = scalar_lea.sflag [#allocation3], 1
    %12 = vsyncpa %s11, 0
    %13 = vsyncpa [#allocation6], 0
    %14 = vsyncpa [#allocation9], 0
    %15 = vsyncpa [#allocation4], 0
    %s16 = scalar_lea.sflag [#allocation4], 1
    %17 = vsyncpa %s16, 0
    loop: start=0, step=1, limit=6
    $region2: #{tpu_custom_call.1} parent=1 // loop_pre_header
      _
    $region3: #{tpu_custom_call.1} parent=1 // loop_header
      %s19 = sphi 0, %s23
      %p20 = scmp.ge.s32.totalorder %s19, 6
      %s29 = sphi 0, %s31
      %s32 = sphi 0, %s29
      %s33 = sphi 0, %s32
      %s49 = sphi 0, %s33
      %s53 = sphi 0, %s53
      %s55 = sphi 0, %s53
      %s56 = sphi 0, %s55
      %s70 = sphi 0, %s56
      %s74 = sphi 0, %s74
      %s76 = sphi 0, %s74
      %s77 = sphi 0, %s76
      %s91 = sphi 0, %s77
      %s95 = sphi 0, %s95
      %s97 = sphi 0, %s95
      %s98 = sphi 0, %s97
      %s112 = sphi 0, %s98
      %s116 = sphi 0, %s116
      %s118 = sphi 0, %s116
      %s119 = sphi 0, %s118
      %s133 = sphi 0, %s119
      %s139 = sphi 0, %s141
      %s142 = sphi 0, %s139
      %s143 = sphi 0, %s142
      %s159 = sphi 0, %s143
    $region4: #{tpu_custom_call.1} parent=1 // loop_header_branch
      %22 = sbr.rel (%p20) target = $region8
    $region5: #{tpu_custom_call.1} parent=1 // loop_body
      %s24 = ssub.s32 %s19, 1
      %s25 = ssub.s32 %s19, 2
      %s26 = sadd.s32 %s19, 1
      %s27 = ssub.s32 %s19, %s26
      %p28 = scmp.eq.s32.totalorder %s27, 0
      %s30 = sadd.s32 %s29, 1
      %s31 = scalar_select %p28, %s29, %s30
      %p34 = pneg %p28
      %p35 = scmp.eq.s32.totalorder %s19, 3
      %p36 = por %p34, %p35
      %p37 = scmp.ne.s32.totalorder %s29, %s32
      %p38 = scmp.eq.s32.totalorder %s19, 0
      %p39 = por %p37, %p38
      %p40 = scmp.ne.s32.totalorder %s29, %s32
      %p41 = scmp.eq.s32.totalorder %s24, 3
      %p42 = por %p40, %p41
      %p43 = scmp.ne.s32.totalorder %s32, %s33
      %p44 = scmp.eq.s32.totalorder %s24, 0
      %p45 = por %p43, %p44
      %p46 = scmp.ne.s32.totalorder %s32, %s33
      %p47 = scmp.eq.s32.totalorder %s25, 3
      %p48 = por %p46, %p47
      %p50 = scmp.ne.s32.totalorder %s33, %s49
      %p51 = scmp.eq.s32.totalorder %s25, 0
      %p52 = por %p50, %p51
      %s54 = sadd.s32 %s53, 1
      %p57 = scmp.eq.s32.totalorder %s19, 3
      %p58 = scmp.ne.s32.totalorder %s53, %s55
      %p59 = scmp.eq.s32.totalorder %s19, 0
      %p60 = por %p58, %p59
      %p61 = scmp.ne.s32.totalorder %s53, %s55
      %p62 = scmp.eq.s32.totalorder %s24, 3
      %p63 = por %p61, %p62
      %p64 = scmp.ne.s32.totalorder %s55, %s56
      %p65 = scmp.eq.s32.totalorder %s24, 0
      %p66 = por %p64, %p65
      %p67 = scmp.ne.s32.totalorder %s55, %s56
      %p68 = scmp.eq.s32.totalorder %s25, 3
      %p69 = por %p67, %p68
      %p71 = scmp.ne.s32.totalorder %s56, %s70
      %p72 = scmp.eq.s32.totalorder %s25, 0
      %p73 = por %p71, %p72
      %s75 = sadd.s32 %s74, 1
      %p78 = scmp.eq.s32.totalorder %s19, 3
      %p79 = scmp.ne.s32.totalorder %s74, %s76
      %p80 = scmp.eq.s32.totalorder %s19, 0
      %p81 = por %p79, %p80
      %p82 = scmp.ne.s32.totalorder %s74, %s76
      %p83 = scmp.eq.s32.totalorder %s24, 3
      %p84 = por %p82, %p83
      %p85 = scmp.ne.s32.totalorder %s76, %s77
      %p86 = scmp.eq.s32.totalorder %s24, 0
      %p87 = por %p85, %p86
      %p88 = scmp.ne.s32.totalorder %s76, %s77
      %p89 = scmp.eq.s32.totalorder %s25, 3
      %p90 = por %p88, %p89
      %p92 = scmp.ne.s32.totalorder %s77, %s91
      %p93 = scmp.eq.s32.totalorder %s25, 0
      %p94 = por %p92, %p93
      %s96 = sadd.s32 %s95, 1
      %p99 = scmp.eq.s32.totalorder %s19, 3
      %p100 = scmp.ne.s32.totalorder %s95, %s97
      %p101 = scmp.eq.s32.totalorder %s19, 0
      %p102 = por %p100, %p101
      %p103 = scmp.ne.s32.totalorder %s95, %s97
      %p104 = scmp.eq.s32.totalorder %s24, 3
      %p105 = por %p103, %p104
      %p106 = scmp.ne.s32.totalorder %s97, %s98
      %p107 = scmp.eq.s32.totalorder %s24, 0
      %p108 = por %p106, %p107
      %p109 = scmp.ne.s32.totalorder %s97, %s98
      %p110 = scmp.eq.s32.totalorder %s25, 3
      %p111 = por %p109, %p110
      %p113 = scmp.ne.s32.totalorder %s98, %s112
      %p114 = scmp.eq.s32.totalorder %s25, 0
      %p115 = por %p113, %p114
      %s117 = sadd.s32 %s116, 1
      %p120 = scmp.eq.s32.totalorder %s19, 3
      %p121 = scmp.ne.s32.totalorder %s116, %s118
      %p122 = scmp.eq.s32.totalorder %s19, 0
      %p123 = por %p121, %p122
      %p124 = scmp.ne.s32.totalorder %s116, %s118
      %p125 = scmp.eq.s32.totalorder %s24, 3
      %p126 = por %p124, %p125
      %p127 = scmp.ne.s32.totalorder %s118, %s119
      %p128 = scmp.eq.s32.totalorder %s24, 0
      %p129 = por %p127, %p128
      %p130 = scmp.ne.s32.totalorder %s118, %s119
      %p131 = scmp.eq.s32.totalorder %s25, 3
      %p132 = por %p130, %p131
      %p134 = scmp.ne.s32.totalorder %s119, %s133
      %p135 = scmp.eq.s32.totalorder %s25, 0
      %p136 = por %p134, %p135
      %s137 = ssub.s32 %s19, %s26
      %p138 = scmp.eq.s32.totalorder %s137, 0
      %s140 = sadd.s32 %s139, 1
      %s141 = scalar_select %p138, %s139, %s140
      %p144 = pneg %p138
      %p145 = scmp.eq.s32.totalorder %s19, 3
      %p146 = por %p144, %p145
      %p147 = scmp.ne.s32.totalorder %s139, %s142
      %p148 = scmp.eq.s32.totalorder %s19, 0
      %p149 = por %p147, %p148
      %p150 = scmp.ne.s32.totalorder %s139, %s142
      %p151 = scmp.eq.s32.totalorder %s24, 3
      %p152 = por %p150, %p151
      %p153 = scmp.ne.s32.totalorder %s142, %s143
      %p154 = scmp.eq.s32.totalorder %s24, 0
      %p155 = por %p153, %p154
      %p156 = scmp.ne.s32.totalorder %s142, %s143
      %p157 = scmp.eq.s32.totalorder %s25, 3
      %p158 = por %p156, %p157
      %p160 = scmp.ne.s32.totalorder %s143, %s159
      %p161 = scmp.eq.s32.totalorder %s25, 0
      %p162 = por %p160, %p161
      %p163 = scmp.le.s32.totalorder 1, %s19
      %p164 = scmp.lt.s32.totalorder %s19, 5
      %p165 = pnand %p163, %p164
      %p166 = pneg %p165
      // Predicated region
      $region9: #{tpu_custom_call.1} parent=5 // pred_check
        _
      $region10: #{tpu_custom_call.1} parent=5 // pred_check_branch
        %168 = sbr.rel (%p165) target = $region12
      $region11: #{tpu_custom_call.1} parent=5 // pred_region
        %s169 = ssub.s32 %s19, 1
        // Predicated region
        $region13: #{tpu_custom_call.1} parent=11 // pred_check
          %p170 = pneg %p66
        $region14: #{tpu_custom_call.1} parent=11 // pred_check_branch
          %172 = sbr.rel (%p170) target = $region16
        $region15: #{tpu_custom_call.1} parent=11 // pred_region
          %174 = vsyncadd [#allocation6], 0
          %s175 = sshll.u32 %s1, 4
          %s176 = int_to_ptr.hbm [resolvable:$true] %s175
          %s177 = sshll.u32 [#allocation5], 4
          %s178 = int_to_ptr.vmem [resolvable:$true] %s177
          %183 = dma.hbm_to_vmem [thread:$0]  %s176, 2048, %s178, [#allocation6], 128, 128, 8
        $region16: #{tpu_custom_call.1} parent=11 // pred_fallthru
          _
        // Predicated region
        $region17: #{tpu_custom_call.1} parent=11 // pred_check
          %p184 = pneg %p87
        $region18: #{tpu_custom_call.1} parent=11 // pred_check_branch
          %186 = sbr.rel (%p184) target = $region20
        $region19: #{tpu_custom_call.1} parent=11 // pred_region
          %188 = vsyncadd [#allocation6], 0
          %s190 = sshll.u32 %s2, 4
          %s191 = int_to_ptr.hbm [resolvable:$true] %s190
          %s192 = sshll.u32 [#allocation7], 4
          %s193 = int_to_ptr.vmem [resolvable:$true] %s192
          %195 = dma.hbm_to_vmem [thread:$0]  %s191, 128, %s193, [#allocation6]
        $region20: #{tpu_custom_call.1} parent=11 // pred_fallthru
          _
        // Predicated region
        $region21: #{tpu_custom_call.1} parent=11 // pred_check
          %p196 = pneg %p108
        $region22: #{tpu_custom_call.1} parent=11 // pred_check_branch
          %198 = sbr.rel (%p196) target = $region24
        $region23: #{tpu_custom_call.1} parent=11 // pred_region
          %200 = vsyncadd [#allocation9], 0
          %s201 = sshll.u32 %s3, 4
          %s202 = int_to_ptr.hbm [resolvable:$true] %s201
          %s203 = sshll.u32 [#allocation8], 4
          %s204 = int_to_ptr.vmem [resolvable:$true] %s203
          %209 = dma.hbm_to_vmem [thread:$0]  %s202, 2048, %s204, [#allocation9], 64, 64, 4
        $region24: #{tpu_custom_call.1} parent=11 // pred_fallthru
          _
        // Predicated region
        $region25: #{tpu_custom_call.1} parent=11 // pred_check
          %p210 = pneg %p129
        $region26: #{tpu_custom_call.1} parent=11 // pred_check_branch
          %212 = sbr.rel (%p210) target = $region28
        $region27: #{tpu_custom_call.1} parent=11 // pred_region
          _
        $region28: #{tpu_custom_call.1} parent=11 // pred_fallthru
          _
      $region12: #{tpu_custom_call.1} parent=5 // pred_fallthru
        _
      %p213 = scmp.lt.s32.totalorder %s19, 4
      // Predicated region
      $region29: #{tpu_custom_call.1} parent=5 // pred_check
        %p214 = pneg %p213
      $region30: #{tpu_custom_call.1} parent=5 // pred_check_branch
        %216 = sbr.rel (%p214) target = $region32
      $region31: #{tpu_custom_call.1} parent=5 // pred_region
        // Predicated region
        $region33: #{tpu_custom_call.1} parent=31 // pred_check
          %p217 = pneg %p39
        $region34: #{tpu_custom_call.1} parent=31 // pred_check_branch
          %219 = sbr.rel (%p217) target = $region36
        $region35: #{tpu_custom_call.1} parent=31 // pred_region
          %s220 = sand.u32 %s29, 1
          %s221 = scalar_lea.sflag [#allocation3], %s220
          %s222 = sand.u32 %s29, 1
          %s223 = smul.addr %s222, 64
          %s224 = scalar_lea.vmem [#allocation2], %s223
          %s225 = smul.u32 8, %s19
          %227 = vsyncadd %s221, 0
          %s228 = smul.addr %s225, 8
          %s229 = scalar_lea.hbm %s0, %s228
          %s230 = sshll.u32 %s229, 4
          %s231 = int_to_ptr.hbm [resolvable:$true] %s230
          %s232 = sshll.u32 %s224, 4
          %s233 = int_to_ptr.vmem [resolvable:$true] %s232
          %238 = dma.hbm_to_vmem [thread:$0]  %s231, 1024, %s233, %s221, 128, 128, 8
        $region36: #{tpu_custom_call.1} parent=31 // pred_fallthru
          _
      $region32: #{tpu_custom_call.1} parent=5 // pred_fallthru
        _
      %p239 = scmp.le.s32.totalorder 1, %s19
      %p240 = scmp.lt.s32.totalorder %s19, 5
      %p241 = pnand %p239, %p240
      %p242 = pneg %p241
      // Predicated region
      $region37: #{tpu_custom_call.1} parent=5 // pred_check
        _
      $region38: #{tpu_custom_call.1} parent=5 // pred_check_branch
        %244 = sbr.rel (%p241) target = $region40
      $region39: #{tpu_custom_call.1} parent=5 // pred_region
        %s245 = ssub.s32 %s19, 1
        %s246 = sand.u32 %s32, 1
        %s247 = scalar_lea.sflag [#allocation3], %s246
        %s248 = sand.u32 %s32, 1
        %s249 = smul.addr %s248, 64
        %s250 = scalar_lea.vmem [#allocation2], %s249
        // Predicated region
        $region41: #{tpu_custom_call.1} parent=39 // pred_check
          %p251 = pneg %p45
        $region42: #{tpu_custom_call.1} parent=39 // pred_check_branch
          %253 = sbr.rel (%p251) target = $region44
        $region43: #{tpu_custom_call.1} parent=39 // pred_region
          %255 = dma.done %s247, 1024
        $region44: #{tpu_custom_call.1} parent=39 // pred_fallthru
          _
        // Predicated region
        $region45: #{tpu_custom_call.1} parent=39 // pred_check
          %p256 = pneg %p66
        $region46: #{tpu_custom_call.1} parent=39 // pred_check_branch
          %258 = sbr.rel (%p256) target = $region48
        $region47: #{tpu_custom_call.1} parent=39 // pred_region
          %260 = dma.done [#allocation6], 2048
        $region48: #{tpu_custom_call.1} parent=39 // pred_fallthru
          _
        // Predicated region
        $region49: #{tpu_custom_call.1} parent=39 // pred_check
          %p261 = pneg %p87
        $region50: #{tpu_custom_call.1} parent=39 // pred_check_branch
          %263 = sbr.rel (%p261) target = $region52
        $region51: #{tpu_custom_call.1} parent=39 // pred_region
          %265 = dma.done [#allocation6], 128
        $region52: #{tpu_custom_call.1} parent=39 // pred_fallthru
          _
        // Predicated region
        $region53: #{tpu_custom_call.1} parent=39 // pred_check
          %p266 = pneg %p108
        $region54: #{tpu_custom_call.1} parent=39 // pred_check_branch
          %268 = sbr.rel (%p266) target = $region56
        $region55: #{tpu_custom_call.1} parent=39 // pred_region
          %270 = dma.done [#allocation9], 2048
        $region56: #{tpu_custom_call.1} parent=39 // pred_fallthru
          _
        %s271 = sand.u32 %s32, 1
        %s272 = scalar_lea.sflag [#allocation3], %s271
        %s273 = sand.u32 %s32, 1
        %s274 = smul.addr %s273, 64
        %s275 = scalar_lea.vmem [#allocation2], %s274
        %p276 = pneg %p45
        %p277 = pneg %p42
        %p278 = pneg %p66
        %p279 = pneg %p63
        %p280 = pneg %p87
        %p281 = pneg %p84
        %p282 = pneg %p108
        %p283 = pneg %p105
        %p284 = pneg %p129
        %p285 = pneg %p126
        %p286 = pneg %p155
        %p287 = pneg %p152
        %s288 = sand.u32 %s142, 1
        %s289 = scalar_lea.sflag [#allocation4], %s288
        %s290 = sand.u32 %s142, 1
        %s291 = smul.addr %s290, 64
        %s292 = scalar_lea.vmem [#allocation10], %s291
        %s293 = smul.u32 8, %s24
        %s294 = smul.u32 8, %s24
        %v295 = vld [vmem:[%s250] sm:$0xff]
        %v296 = vld [vmem:[%s250 + $0x8] sm:$0xff]
        %v297 = vld [vmem:[%s250 + $0x10] sm:$0xff]
        %v298 = vld [vmem:[%s250 + $0x18] sm:$0xff]
        %v299 = vld [vmem:[%s250 + $0x20] sm:$0xff]
        %v300 = vld [vmem:[%s250 + $0x28] sm:$0xff]
        %v301 = vld [vmem:[%s250 + $0x30] sm:$0xff]
        %v302 = vld [vmem:[%s250 + $0x38] sm:$0xff]
        %v303 = vpack.c.bf16 %v296, %v295
        %v304 = vpack.c.bf16 %v298, %v297
        %v305 = vpack.c.bf16 %v300, %v299
        %v306 = vpack.c.bf16 %v302, %v301
        %v307 = vld [vmem:[#allocation5] sm:$0xff]
        %v308 = vld [vmem:[#allocation5 + $0x8] sm:$0xff]
        %v309 = vld [vmem:[#allocation5 + $0x10] sm:$0xff]
        %v310 = vld [vmem:[#allocation5 + $0x18] sm:$0xff]
        %v311 = vld [vmem:[#allocation5 + $0x20] sm:$0xff]
        %v312 = vld [vmem:[#allocation5 + $0x28] sm:$0xff]
        %v313 = vld [vmem:[#allocation5 + $0x30] sm:$0xff]
        %v314 = vld [vmem:[#allocation5 + $0x38] sm:$0xff]
        %v315 = vld [vmem:[#allocation5 + $0x40] sm:$0xff]
        %v316 = vld [vmem:[#allocation5 + $0x48] sm:$0xff]
        %v317 = vld [vmem:[#allocation5 + $0x50] sm:$0xff]
        %v318 = vld [vmem:[#allocation5 + $0x58] sm:$0xff]
        %v319 = vld [vmem:[#allocation5 + $0x60] sm:$0xff]
        %v320 = vld [vmem:[#allocation5 + $0x68] sm:$0xff]
        %v321 = vld [vmem:[#allocation5 + $0x70] sm:$0xff]
        %v322 = vld [vmem:[#allocation5 + $0x78] sm:$0xff]
        %v323 = vld [vmem:[#allocation7] ss:$4 sm:$0x3]
        %v325 = vperm.slane %v323, 0
        %v326 = vperm.slane %v323, 1
        %v345 = vunpack.c.l.b16 %v307
        %v346 = vunpack.c.h.b16 %v307
        %v347 = vunpack.c.l.b16 %v308
        %v348 = vunpack.c.h.b16 %v308
        %v349 = vunpack.c.l.b16 %v309
        %v350 = vunpack.c.h.b16 %v309
        %v351 = vunpack.c.l.b16 %v310
        %v352 = vunpack.c.h.b16 %v310
        %v353 = vunpack.c.l.b16 %v311
        %v354 = vunpack.c.h.b16 %v311
        %v355 = vunpack.c.l.b16 %v312
        %v356 = vunpack.c.h.b16 %v312
        %v357 = vunpack.c.l.b16 %v313
        %v358 = vunpack.c.h.b16 %v313
        %v359 = vunpack.c.l.b16 %v314
        %v360 = vunpack.c.h.b16 %v314
        %v361 = vunpack.c.l.b16 %v315
        %v362 = vunpack.c.h.b16 %v315
        %v363 = vunpack.c.l.b16 %v316
        %v364 = vunpack.c.h.b16 %v316
        %v365 = vunpack.c.l.b16 %v317
        %v366 = vunpack.c.h.b16 %v317
        %v367 = vunpack.c.l.b16 %v318
        %v368 = vunpack.c.h.b16 %v318
        %v369 = vunpack.c.l.b16 %v319
        %v370 = vunpack.c.h.b16 %v319
        %v371 = vunpack.c.l.b16 %v320
        %v372 = vunpack.c.h.b16 %v320
        %v373 = vunpack.c.l.b16 %v321
        %v374 = vunpack.c.h.b16 %v321
        %v375 = vunpack.c.l.b16 %v322
        %v376 = vunpack.c.h.b16 %v322
        %v377 = vpack.c.b16 %v347, %v345
        %v378 = vpack.c.b16 %v348, %v346
        %v379 = vpack.c.b16 %v351, %v349
        %v380 = vpack.c.b16 %v352, %v350
        %v381 = vpack.c.b16 %v355, %v353
        %v382 = vpack.c.b16 %v356, %v354
        %v383 = vpack.c.b16 %v359, %v357
        %v384 = vpack.c.b16 %v360, %v358
        %v385 = vpack.c.b16 %v363, %v361
        %v386 = vpack.c.b16 %v364, %v362
        %v387 = vpack.c.b16 %v367, %v365
        %v388 = vpack.c.b16 %v368, %v366
        %v389 = vpack.c.b16 %v371, %v369
        %v390 = vpack.c.b16 %v372, %v370
        %v391 = vpack.c.b16 %v375, %v373
        %v392 = vpack.c.b16 %v376, %v374
        %409 = vmatpush.bf16.msra.mxu0 %v391
        %410 = vmatpush.bf16.msra.mxu0 %v389
        %411 = vmatpush.bf16.msra.mxu0 %v387
        %412 = vmatpush.bf16.msra.mxu0 %v385
        %413 = vmatpush.bf16.msra.mxu0 %v383
        %414 = vmatpush.bf16.msra.mxu0 %v381
        %415 = vmatpush.bf16.msra.mxu0 %v379
        %416 = vmatpush.bf16.msra.mxu0 %v377
        %417 = vmatmul.bf16.gmra.mxu0 %v303
        %v418 = vpop.f32.mrf.mxu0
        %v419 = vadd.f32 %v325, %v418
        %v420 = vpop.f32.mrf.mxu0
        %v421 = vadd.f32 %v325, %v420
        %422 = vmatmul.bf16.gmra.mxu0 %v304
        %v423 = vpop.f32.mrf.mxu0
        %v424 = vadd.f32 %v325, %v423
        %v425 = vpop.f32.mrf.mxu0
        %v426 = vadd.f32 %v325, %v425
        %427 = vmatmul.bf16.gmra.mxu0 %v305
        %v428 = vpop.f32.mrf.mxu0
        %v429 = vadd.f32 %v325, %v428
        %v430 = vpop.f32.mrf.mxu0
        %v431 = vadd.f32 %v325, %v430
        %432 = vmatmul.bf16.gmra.mxu0 %v306
        %v433 = vpop.f32.mrf.mxu0
        %v434 = vadd.f32 %v325, %v433
        %v435 = vpop.f32.mrf.mxu0
        %v436 = vadd.f32 %v325, %v435
        %437 = vdwg.mxu0
        %438 = vmatpush.bf16.msra.mxu0 %v392
        %439 = vmatpush.bf16.msra.mxu0 %v390
        %440 = vmatpush.bf16.msra.mxu0 %v388
        %441 = vmatpush.bf16.msra.mxu0 %v386
        %442 = vmatpush.bf16.msra.mxu0 %v384
        %443 = vmatpush.bf16.msra.mxu0 %v382
        %444 = vmatpush.bf16.msra.mxu0 %v380
        %445 = vmatpush.bf16.msra.mxu0 %v378
        %446 = vmatmul.bf16.gmra.mxu0 %v303
        %v447 = vpop.f32.mrf.mxu0
        %v448 = vadd.f32 %v326, %v447
        %v449 = vpop.f32.mrf.mxu0
        %v450 = vadd.f32 %v326, %v449
        %451 = vmatmul.bf16.gmra.mxu0 %v304
        %v452 = vpop.f32.mrf.mxu0
        %v453 = vadd.f32 %v326, %v452
        %v454 = vpop.f32.mrf.mxu0
        %v455 = vadd.f32 %v326, %v454
        %456 = vmatmul.bf16.gmra.mxu0 %v305
        %v457 = vpop.f32.mrf.mxu0
        %v458 = vadd.f32 %v326, %v457
        %v459 = vpop.f32.mrf.mxu0
        %v460 = vadd.f32 %v326, %v459
        %461 = vmatmul.bf16.gmra.mxu0 %v306
        %v462 = vpop.f32.mrf.mxu0
        %v463 = vadd.f32 %v326, %v462
        %v464 = vpop.f32.mrf.mxu0
        %v465 = vadd.f32 %v326, %v464
        %466 = vdwg.mxu0
        %v467 = vadd.f32 %v419, %v448
        %468 = vadd.xlane.f32.xlu0 %v467
        %v469 = vpop.xlane.xlu0 %468
        %v470 = vadd.f32 %v421, %v450
        %471 = vadd.xlane.f32.xlu0 %v470
        %v472 = vpop.xlane.xlu0 %471
        %v473 = vadd.f32 %v424, %v453
        %474 = vadd.xlane.f32.xlu0 %v473
        %v475 = vpop.xlane.xlu0 %474
        %v476 = vadd.f32 %v426, %v455
        %477 = vadd.xlane.f32.xlu0 %v476
        %v478 = vpop.xlane.xlu0 %477
        %v479 = vadd.f32 %v429, %v458
        %480 = vadd.xlane.f32.xlu0 %v479
        %v481 = vpop.xlane.xlu0 %480
        %v482 = vadd.f32 %v431, %v460
        %483 = vadd.xlane.f32.xlu0 %v482
        %v484 = vpop.xlane.xlu0 %483
        %v485 = vadd.f32 %v434, %v463
        %486 = vadd.xlane.f32.xlu0 %v485
        %v487 = vpop.xlane.xlu0 %486
        %v488 = vadd.f32 %v436, %v465
        %489 = vadd.xlane.f32.xlu0 %v488
        %v490 = vpop.xlane.xlu0 %489
        %v491 = vrcp.pop 256.0
        %v492 = vmul.f32 256.0, %v491
        %v493 = vsub.f32 1.0, %v492
        %v494 = vmul.f32 %v491, %v493
        %v495 = vadd.f32 %v491, %v494
        %vm496 = vweird.f32 %v491
        %v497 = vsel %vm496, %v491, %v495
        %v498 = vmul.f32 %v469, %v497
        %v499 = vmul.f32 %v472, %v497
        %v500 = vmul.f32 %v475, %v497
        %v501 = vmul.f32 %v478, %v497
        %v502 = vmul.f32 %v481, %v497
        %v503 = vmul.f32 %v484, %v497
        %v504 = vmul.f32 %v487, %v497
        %v505 = vmul.f32 %v490, %v497
        %v506 = vmul.f32 %v419, %v419
        %v507 = vmul.f32 %v448, %v448
        %v508 = vmul.f32 %v421, %v421
        %v509 = vmul.f32 %v450, %v450
        %v510 = vmul.f32 %v424, %v424
        %v511 = vmul.f32 %v453, %v453
        %v512 = vmul.f32 %v426, %v426
        %v513 = vmul.f32 %v455, %v455
        %v514 = vmul.f32 %v429, %v429
        %v515 = vmul.f32 %v458, %v458
        %v516 = vmul.f32 %v431, %v431
        %v517 = vmul.f32 %v460, %v460
        %v518 = vmul.f32 %v434, %v434
        %v519 = vmul.f32 %v463, %v463
        %v520 = vmul.f32 %v436, %v436
        %v521 = vmul.f32 %v465, %v465
        %v522 = vadd.f32 %v506, %v507
        %523 = vadd.xlane.f32.xlu0 %v522
        %v524 = vpop.xlane.xlu0 %523
        %v525 = vadd.f32 %v508, %v509
        %526 = vadd.xlane.f32.xlu0 %v525
        %v527 = vpop.xlane.xlu0 %526
        %v528 = vadd.f32 %v510, %v511
        %529 = vadd.xlane.f32.xlu0 %v528
        %v530 = vpop.xlane.xlu0 %529
        %v531 = vadd.f32 %v512, %v513
        %532 = vadd.xlane.f32.xlu0 %v531
        %v533 = vpop.xlane.xlu0 %532
        %v534 = vadd.f32 %v514, %v515
        %535 = vadd.xlane.f32.xlu0 %v534
        %v536 = vpop.xlane.xlu0 %535
        %v537 = vadd.f32 %v516, %v517
        %538 = vadd.xlane.f32.xlu0 %v537
        %v539 = vpop.xlane.xlu0 %538
        %v540 = vadd.f32 %v518, %v519
        %541 = vadd.xlane.f32.xlu0 %v540
        %v542 = vpop.xlane.xlu0 %541
        %v543 = vadd.f32 %v520, %v521
        %544 = vadd.xlane.f32.xlu0 %v543
        %v545 = vpop.xlane.xlu0 %544
        %v546 = vmul.f32 %v524, %v497
        %v547 = vmul.f32 %v527, %v497
        %v548 = vmul.f32 %v530, %v497
        %v549 = vmul.f32 %v533, %v497
        %v550 = vmul.f32 %v536, %v497
        %v551 = vmul.f32 %v539, %v497
        %v552 = vmul.f32 %v542, %v497
        %v553 = vmul.f32 %v545, %v497
        %v554 = vmul.f32 %v498, %v498
        %v555 = vmul.f32 %v499, %v499
        %v556 = vmul.f32 %v500, %v500
        %v557 = vmul.f32 %v501, %v501
        %v558 = vmul.f32 %v502, %v502
        %v559 = vmul.f32 %v503, %v503
        %v560 = vmul.f32 %v504, %v504
        %v561 = vmul.f32 %v505, %v505
        %v562 = vsub.f32 %v546, %v554
        %v563 = vsub.f32 %v547, %v555
        %v564 = vsub.f32 %v548, %v556
        %v565 = vsub.f32 %v549, %v557
        %v566 = vsub.f32 %v550, %v558
        %v567 = vsub.f32 %v551, %v559
        %v568 = vsub.f32 %v552, %v560
        %v569 = vsub.f32 %v553, %v561
        %v570 = vmax.f32 %v562, 0.0
        %v571 = vmax.f32 %v563, 0.0
        %v572 = vmax.f32 %v564, 0.0
        %v573 = vmax.f32 %v565, 0.0
        %v574 = vmax.f32 %v566, 0.0
        %v575 = vmax.f32 %v567, 0.0
        %v576 = vmax.f32 %v568, 0.0
        %v577 = vmax.f32 %v569, 0.0
        %v578 = vsub.f32 %v419, %v498
        %v579 = vsub.f32 %v448, %v498
        %v580 = vsub.f32 %v421, %v499
        %v581 = vsub.f32 %v450, %v499
        %v582 = vsub.f32 %v424, %v500
        %v583 = vsub.f32 %v453, %v500
        %v584 = vsub.f32 %v426, %v501
        %v585 = vsub.f32 %v455, %v501
        %v586 = vsub.f32 %v429, %v502
        %v587 = vsub.f32 %v458, %v502
        %v588 = vsub.f32 %v431, %v503
        %v589 = vsub.f32 %v460, %v503
        %v590 = vsub.f32 %v434, %v504
        %v591 = vsub.f32 %v463, %v504
        %v592 = vsub.f32 %v436, %v505
        %v593 = vsub.f32 %v465, %v505
        %v594 = vadd.f32 %v570, 1e-05
        %v595 = vadd.f32 %v571, 1e-05
        %v596 = vadd.f32 %v572, 1e-05
        %v597 = vadd.f32 %v573, 1e-05
        %v598 = vadd.f32 %v574, 1e-05
        %v599 = vadd.f32 %v575, 1e-05
        %v600 = vadd.f32 %v576, 1e-05
        %v601 = vadd.f32 %v577, 1e-05
        %v602 = vrsqrt.pop %v594
        %v603 = vmul.f32 %v602, %v594
        %v604 = vmul.f32 %v603, %v602
        %v605 = vmul.f32 0.5, %v604
        %v606 = vsub.f32 1.5, %v605
        %v607 = vmul.f32 %v602, %v606
        %vm608 = vweird.f32 %v594
        %vm609 = vweird.f32 %v602
        %vm610 = vmor %vm608, %vm609
        %v611 = vsel %vm610, %v602, %v607
        %v612 = vrsqrt.pop %v595
        %v613 = vmul.f32 %v612, %v595
        %v614 = vmul.f32 %v613, %v612
        %v615 = vmul.f32 0.5, %v614
        %v616 = vsub.f32 1.5, %v615
        %v617 = vmul.f32 %v612, %v616
        %vm618 = vweird.f32 %v595
        %vm619 = vweird.f32 %v612
        %vm620 = vmor %vm618, %vm619
        %v621 = vsel %vm620, %v612, %v617
        %v622 = vrsqrt.pop %v596
        %v623 = vmul.f32 %v622, %v596
        %v624 = vmul.f32 %v623, %v622
        %v625 = vmul.f32 0.5, %v624
        %v626 = vsub.f32 1.5, %v625
        %v627 = vmul.f32 %v622, %v626
        %vm628 = vweird.f32 %v596
        %vm629 = vweird.f32 %v622
        %vm630 = vmor %vm628, %vm629
        %v631 = vsel %vm630, %v622, %v627
        %v632 = vrsqrt.pop %v597
        %v633 = vmul.f32 %v632, %v597
        %v634 = vmul.f32 %v633, %v632
        %v635 = vmul.f32 0.5, %v634
        %v636 = vsub.f32 1.5, %v635
        %v637 = vmul.f32 %v632, %v636
        %vm638 = vweird.f32 %v597
        %vm639 = vweird.f32 %v632
        %vm640 = vmor %vm638, %vm639
        %v641 = vsel %vm640, %v632, %v637
        %v642 = vrsqrt.pop %v598
        %v643 = vmul.f32 %v642, %v598
        %v644 = vmul.f32 %v643, %v642
        %v645 = vmul.f32 0.5, %v644
        %v646 = vsub.f32 1.5, %v645
        %v647 = vmul.f32 %v642, %v646
        %vm648 = vweird.f32 %v598
        %vm649 = vweird.f32 %v642
        %vm650 = vmor %vm648, %vm649
        %v651 = vsel %vm650, %v642, %v647
        %v652 = vrsqrt.pop %v599
        %v653 = vmul.f32 %v652, %v599
        %v654 = vmul.f32 %v653, %v652
        %v655 = vmul.f32 0.5, %v654
        %v656 = vsub.f32 1.5, %v655
        %v657 = vmul.f32 %v652, %v656
        %vm658 = vweird.f32 %v599
        %vm659 = vweird.f32 %v652
        %vm660 = vmor %vm658, %vm659
        %v661 = vsel %vm660, %v652, %v657
        %v662 = vrsqrt.pop %v600
        %v663 = vmul.f32 %v662, %v600
        %v664 = vmul.f32 %v663, %v662
        %v665 = vmul.f32 0.5, %v664
        %v666 = vsub.f32 1.5, %v665
        %v667 = vmul.f32 %v662, %v666
        %vm668 = vweird.f32 %v600
        %vm669 = vweird.f32 %v662
        %vm670 = vmor %vm668, %vm669
        %v671 = vsel %vm670, %v662, %v667
        %v672 = vrsqrt.pop %v601
        %v673 = vmul.f32 %v672, %v601
        %v674 = vmul.f32 %v673, %v672
        %v675 = vmul.f32 0.5, %v674
        %v676 = vsub.f32 1.5, %v675
        %v677 = vmul.f32 %v672, %v676
        %vm678 = vweird.f32 %v601
        %vm679 = vweird.f32 %v672
        %vm680 = vmor %vm678, %vm679
        %v681 = vsel %vm680, %v672, %v677
        %v682 = vmul.f32 %v578, %v611
        %v683 = vmul.f32 %v579, %v611
        %v684 = vmul.f32 %v580, %v621
        %v685 = vmul.f32 %v581, %v621
        %v686 = vmul.f32 %v582, %v631
        %v687 = vmul.f32 %v583, %v631
        %v688 = vmul.f32 %v584, %v641
        %v689 = vmul.f32 %v585, %v641
        %v690 = vmul.f32 %v586, %v651
        %v691 = vmul.f32 %v587, %v651
        %v692 = vmul.f32 %v588, %v661
        %v693 = vmul.f32 %v589, %v661
        %v694 = vmul.f32 %v590, %v671
        %v695 = vmul.f32 %v591, %v671
        %v696 = vmul.f32 %v592, %v681
        %v697 = vmul.f32 %v593, %v681
        %s698 = scalar_lea.vmem [#allocation7], 1
        %v699 = vld [vmem:[%s698] ss:$4 sm:$0x3]
        %v701 = vperm.slane %v699, 0
        %v702 = vperm.slane %v699, 1
        %v705 = vmul.f32 %v682, %v701
        %v706 = vmul.f32 %v683, %v702
        %v707 = vmul.f32 %v684, %v701
        %v708 = vmul.f32 %v685, %v702
        %v709 = vmul.f32 %v686, %v701
        %v710 = vmul.f32 %v687, %v702
        %v711 = vmul.f32 %v688, %v701
        %v712 = vmul.f32 %v689, %v702
        %v713 = vmul.f32 %v690, %v701
        %v714 = vmul.f32 %v691, %v702
        %v715 = vmul.f32 %v692, %v701
        %v716 = vmul.f32 %v693, %v702
        %v717 = vmul.f32 %v694, %v701
        %v718 = vmul.f32 %v695, %v702
        %v719 = vmul.f32 %v696, %v701
        %v720 = vmul.f32 %v697, %v702
        %s721 = scalar_lea.vmem [#allocation7], 2
        %v722 = vld [vmem:[%s721] ss:$4 sm:$0x3]
        %v724 = vperm.slane %v722, 0
        %v725 = vperm.slane %v722, 1
        %v728 = vadd.f32 %v705, %v724
        %v729 = vadd.f32 %v706, %v725
        %v730 = vadd.f32 %v707, %v724
        %v731 = vadd.f32 %v708, %v725
        %v732 = vadd.f32 %v709, %v724
        %v733 = vadd.f32 %v710, %v725
        %v734 = vadd.f32 %v711, %v724
        %v735 = vadd.f32 %v712, %v725
        %v736 = vadd.f32 %v713, %v724
        %v737 = vadd.f32 %v714, %v725
        %v738 = vadd.f32 %v715, %v724
        %v739 = vadd.f32 %v716, %v725
        %v740 = vadd.f32 %v717, %v724
        %v741 = vadd.f32 %v718, %v725
        %v742 = vadd.f32 %v719, %v724
        %v743 = vadd.f32 %v720, %v725
        %vm744 = vcmp.gt.f32.partialorder %v728, 0.0
        %vm745 = vcmp.gt.f32.partialorder %v729, 0.0
        %vm746 = vcmp.gt.f32.partialorder %v730, 0.0
        %vm747 = vcmp.gt.f32.partialorder %v731, 0.0
        %vm748 = vcmp.gt.f32.partialorder %v732, 0.0
        %vm749 = vcmp.gt.f32.partialorder %v733, 0.0
        %vm750 = vcmp.gt.f32.partialorder %v734, 0.0
        %vm751 = vcmp.gt.f32.partialorder %v735, 0.0
        %vm752 = vcmp.gt.f32.partialorder %v736, 0.0
        %vm753 = vcmp.gt.f32.partialorder %v737, 0.0
        %vm754 = vcmp.gt.f32.partialorder %v738, 0.0
        %vm755 = vcmp.gt.f32.partialorder %v739, 0.0
        %vm756 = vcmp.gt.f32.partialorder %v740, 0.0
        %vm757 = vcmp.gt.f32.partialorder %v741, 0.0
        %vm758 = vcmp.gt.f32.partialorder %v742, 0.0
        %vm759 = vcmp.gt.f32.partialorder %v743, 0.0
        %v760 = vmul.f32 %v728, 0.2
        %v761 = vmul.f32 %v729, 0.2
        %v762 = vmul.f32 %v730, 0.2
        %v763 = vmul.f32 %v731, 0.2
        %v764 = vmul.f32 %v732, 0.2
        %v765 = vmul.f32 %v733, 0.2
        %v766 = vmul.f32 %v734, 0.2
        %v767 = vmul.f32 %v735, 0.2
        %v768 = vmul.f32 %v736, 0.2
        %v769 = vmul.f32 %v737, 0.2
        %v770 = vmul.f32 %v738, 0.2
        %v771 = vmul.f32 %v739, 0.2
        %v772 = vmul.f32 %v740, 0.2
        %v773 = vmul.f32 %v741, 0.2
        %v774 = vmul.f32 %v742, 0.2
        %v775 = vmul.f32 %v743, 0.2
        %v776 = vsel %vm744, %v728, %v760
        %v777 = vsel %vm745, %v729, %v761
        %v778 = vsel %vm746, %v730, %v762
        %v779 = vsel %vm747, %v731, %v763
        %v780 = vsel %vm748, %v732, %v764
        %v781 = vsel %vm749, %v733, %v765
        %v782 = vsel %vm750, %v734, %v766
        %v783 = vsel %vm751, %v735, %v767
        %v784 = vsel %vm752, %v736, %v768
        %v785 = vsel %vm753, %v737, %v769
        %v786 = vsel %vm754, %v738, %v770
        %v787 = vsel %vm755, %v739, %v771
        %v788 = vsel %vm756, %v740, %v772
        %v789 = vsel %vm757, %v741, %v773
        %v790 = vsel %vm758, %v742, %v774
        %v791 = vsel %vm759, %v743, %v775
        %v792 = vpack.c.bf16 %v778, %v776
        %v793 = vpack.c.bf16 %v779, %v777
        %v794 = vpack.c.bf16 %v782, %v780
        %v795 = vpack.c.bf16 %v783, %v781
        %v796 = vpack.c.bf16 %v786, %v784
        %v797 = vpack.c.bf16 %v787, %v785
        %v798 = vpack.c.bf16 %v790, %v788
        %v799 = vpack.c.bf16 %v791, %v789
        %v800 = vld [vmem:[#allocation8] sm:$0xf]
        %v801 = vld [vmem:[#allocation8 + $0x4] sm:$0xf]
        %v802 = vld [vmem:[#allocation8 + $0x8] sm:$0xf]
        %v803 = vld [vmem:[#allocation8 + $0xc] sm:$0xf]
        %v804 = vld [vmem:[#allocation8 + $0x10] sm:$0xf]
        %v805 = vld [vmem:[#allocation8 + $0x14] sm:$0xf]
        %v806 = vld [vmem:[#allocation8 + $0x18] sm:$0xf]
        %v807 = vld [vmem:[#allocation8 + $0x1c] sm:$0xf]
        %v808 = vld [vmem:[#allocation8 + $0x20] sm:$0xf]
        %v809 = vld [vmem:[#allocation8 + $0x24] sm:$0xf]
        %v810 = vld [vmem:[#allocation8 + $0x28] sm:$0xf]
        %v811 = vld [vmem:[#allocation8 + $0x2c] sm:$0xf]
        %v812 = vld [vmem:[#allocation8 + $0x30] sm:$0xf]
        %v813 = vld [vmem:[#allocation8 + $0x34] sm:$0xf]
        %v814 = vld [vmem:[#allocation8 + $0x38] sm:$0xf]
        %v815 = vld [vmem:[#allocation8 + $0x3c] sm:$0xf]
        %v816 = vld [vmem:[#allocation8 + $0x40] sm:$0xf]
        %v817 = vld [vmem:[#allocation8 + $0x44] sm:$0xf]
        %v818 = vld [vmem:[#allocation8 + $0x48] sm:$0xf]
        %v819 = vld [vmem:[#allocation8 + $0x4c] sm:$0xf]
        %v820 = vld [vmem:[#allocation8 + $0x50] sm:$0xf]
        %v821 = vld [vmem:[#allocation8 + $0x54] sm:$0xf]
        %v822 = vld [vmem:[#allocation8 + $0x58] sm:$0xf]
        %v823 = vld [vmem:[#allocation8 + $0x5c] sm:$0xf]
        %v824 = vld [vmem:[#allocation8 + $0x60] sm:$0xf]
        %v825 = vld [vmem:[#allocation8 + $0x64] sm:$0xf]
        %v826 = vld [vmem:[#allocation8 + $0x68] sm:$0xf]
        %v827 = vld [vmem:[#allocation8 + $0x6c] sm:$0xf]
        %v828 = vld [vmem:[#allocation8 + $0x70] sm:$0xf]
        %v829 = vld [vmem:[#allocation8 + $0x74] sm:$0xf]
        %v830 = vld [vmem:[#allocation8 + $0x78] sm:$0xf]
        %v831 = vld [vmem:[#allocation8 + $0x7c] sm:$0xf]
        %v864 = vunpack.c.l.b16 %v800
        %v865 = vunpack.c.l.b16 %v801
        %v866 = vunpack.c.l.b16 %v802
        %v867 = vunpack.c.l.b16 %v803
        %v868 = vunpack.c.l.b16 %v804
        %v869 = vunpack.c.l.b16 %v805
        %v870 = vunpack.c.l.b16 %v806
        %v871 = vunpack.c.l.b16 %v807
        %v872 = vunpack.c.l.b16 %v808
        %v873 = vunpack.c.l.b16 %v809
        %v874 = vunpack.c.l.b16 %v810
        %v875 = vunpack.c.l.b16 %v811
        %v876 = vunpack.c.l.b16 %v812
        %v877 = vunpack.c.l.b16 %v813
        %v878 = vunpack.c.l.b16 %v814
        %v879 = vunpack.c.l.b16 %v815
        %v880 = vunpack.c.l.b16 %v816
        %v881 = vunpack.c.l.b16 %v817
        %v882 = vunpack.c.l.b16 %v818
        %v883 = vunpack.c.l.b16 %v819
        %v884 = vunpack.c.l.b16 %v820
        %v885 = vunpack.c.l.b16 %v821
        %v886 = vunpack.c.l.b16 %v822
        %v887 = vunpack.c.l.b16 %v823
        %v888 = vunpack.c.l.b16 %v824
        %v889 = vunpack.c.l.b16 %v825
        %v890 = vunpack.c.l.b16 %v826
        %v891 = vunpack.c.l.b16 %v827
        %v892 = vunpack.c.l.b16 %v828
        %v893 = vunpack.c.l.b16 %v829
        %v894 = vunpack.c.l.b16 %v830
        %v895 = vunpack.c.l.b16 %v831
        %v896 = vpack.c.b16 %v865, %v864
        %v897 = vpack.c.b16 %v867, %v866
        %v898 = vpack.c.b16 %v869, %v868
        %v899 = vpack.c.b16 %v871, %v870
        %v900 = vpack.c.b16 %v873, %v872
        %v901 = vpack.c.b16 %v875, %v874
        %v902 = vpack.c.b16 %v877, %v876
        %v903 = vpack.c.b16 %v879, %v878
        %v904 = vpack.c.b16 %v881, %v880
        %v905 = vpack.c.b16 %v883, %v882
        %v906 = vpack.c.b16 %v885, %v884
        %v907 = vpack.c.b16 %v887, %v886
        %v908 = vpack.c.b16 %v889, %v888
        %v909 = vpack.c.b16 %v891, %v890
        %v910 = vpack.c.b16 %v893, %v892
        %v911 = vpack.c.b16 %v895, %v894
        %928 = vmatpush.bf16.msra.mxu0 %v903
        %929 = vmatpush.bf16.msra.mxu0 %v902
        %930 = vmatpush.bf16.msra.mxu0 %v901
        %931 = vmatpush.bf16.msra.mxu0 %v900
        %932 = vmatpush.bf16.msra.mxu0 %v899
        %933 = vmatpush.bf16.msra.mxu0 %v898
        %934 = vmatpush.bf16.msra.mxu0 %v897
        %935 = vmatpush.bf16.msra.mxu0 %v896
        %936 = vmatmul.bf16.gmra.mxu0 %v792
        %v937 = vpop.f32.mrf.mxu0
        %v938 = vadd.f32 0.0, %v937
        %v939 = vpop.f32.mrf.mxu0
        %v940 = vadd.f32 0.0, %v939
        %941 = vmatmul.bf16.gmra.mxu0 %v794
        %v942 = vpop.f32.mrf.mxu0
        %v943 = vadd.f32 0.0, %v942
        %v944 = vpop.f32.mrf.mxu0
        %v945 = vadd.f32 0.0, %v944
        %946 = vmatmul.bf16.gmra.mxu0 %v796
        %v947 = vpop.f32.mrf.mxu0
        %v948 = vadd.f32 0.0, %v947
        %v949 = vpop.f32.mrf.mxu0
        %v950 = vadd.f32 0.0, %v949
        %951 = vmatmul.bf16.gmra.mxu0 %v798
        %v952 = vpop.f32.mrf.mxu0
        %v953 = vadd.f32 0.0, %v952
        %v954 = vpop.f32.mrf.mxu0
        %v955 = vadd.f32 0.0, %v954
        %956 = vdwg.mxu0
        %957 = vmatpush.bf16.msra.mxu0 %v911
        %958 = vmatpush.bf16.msra.mxu0 %v910
        %959 = vmatpush.bf16.msra.mxu0 %v909
        %960 = vmatpush.bf16.msra.mxu0 %v908
        %961 = vmatpush.bf16.msra.mxu0 %v907
        %962 = vmatpush.bf16.msra.mxu0 %v906
        %963 = vmatpush.bf16.msra.mxu0 %v905
        %964 = vmatpush.bf16.msra.mxu0 %v904
        %965 = vmatmul.bf16.gmra.mxu0 %v793
        %v966 = vpop.f32.mrf.mxu0
        %v967 = vadd.f32 %v938, %v966
        %v968 = vpop.f32.mrf.mxu0
        %v969 = vadd.f32 %v940, %v968
        %970 = vmatmul.bf16.gmra.mxu0 %v795
        %v971 = vpop.f32.mrf.mxu0
        %v972 = vadd.f32 %v943, %v971
        %v973 = vpop.f32.mrf.mxu0
        %v974 = vadd.f32 %v945, %v973
        %975 = vmatmul.bf16.gmra.mxu0 %v797
        %v976 = vpop.f32.mrf.mxu0
        %v977 = vadd.f32 %v948, %v976
        %v978 = vpop.f32.mrf.mxu0
        %v979 = vadd.f32 %v950, %v978
        %980 = vmatmul.bf16.gmra.mxu0 %v799
        %v981 = vpop.f32.mrf.mxu0
        %v982 = vadd.f32 %v953, %v981
        %v983 = vpop.f32.mrf.mxu0
        %v984 = vadd.f32 %v955, %v983
        %985 = vdwg.mxu0
        %v986 = vadd.f32 %v295, %v967
        %v987 = vadd.f32 %v296, %v969
        %v988 = vadd.f32 %v297, %v972
        %v989 = vadd.f32 %v298, %v974
        %v990 = vadd.f32 %v299, %v977
        %v991 = vadd.f32 %v300, %v979
        %v992 = vadd.f32 %v301, %v982
        %v993 = vadd.f32 %v302, %v984
        %v994 = vld [vmem:[%s4] sm:$0x1]
        %v996 = vperm.slane %v994, 0
        %v998 = vadd.f32 %v986, %v996
        %v999 = vadd.f32 %v987, %v996
        %v1000 = vadd.f32 %v988, %v996
        %v1001 = vadd.f32 %v989, %v996
        %v1002 = vadd.f32 %v990, %v996
        %v1003 = vadd.f32 %v991, %v996
        %v1004 = vadd.f32 %v992, %v996
        %v1005 = vadd.f32 %v993, %v996
        %1006 = vst [vmem:[%s292] sm:$0xff] %v998
        %1007 = vst [vmem:[%s292 + $0x8] sm:$0xff] %v999
        %1008 = vst [vmem:[%s292 + $0x10] sm:$0xff] %v1000
        %1009 = vst [vmem:[%s292 + $0x18] sm:$0xff] %v1001
        %1010 = vst [vmem:[%s292 + $0x20] sm:$0xff] %v1002
        %1011 = vst [vmem:[%s292 + $0x28] sm:$0xff] %v1003
        %1012 = vst [vmem:[%s292 + $0x30] sm:$0xff] %v1004
        %1013 = vst [vmem:[%s292 + $0x38] sm:$0xff] %v1005
        %s1014 = sand.u32 %s142, 1
        %s1015 = scalar_lea.sflag [#allocation4], %s1014
        %s1016 = sand.u32 %s142, 1
        %s1017 = smul.addr %s1016, 64
        %s1018 = scalar_lea.vmem [#allocation10], %s1017
        // Predicated region
        $region57: #{tpu_custom_call.1} parent=39 // pred_check
          %p1019 = pneg %p152
        $region58: #{tpu_custom_call.1} parent=39 // pred_check_branch
          %1021 = sbr.rel (%p1019) target = $region60
        $region59: #{tpu_custom_call.1} parent=39 // pred_region
          %s1022 = smul.u32 8, %s24
          %1024 = vsyncadd %s1015, 0
          %s1025 = smul.addr %s1022, 8
          %s1026 = scalar_lea.hbm %s5, %s1025
          %s1027 = sshll.u32 %s1018, 4
          %s1028 = int_to_ptr.vmem [resolvable:$true] %s1027
          %s1029 = sshll.u32 %s1026, 4
          %s1030 = int_to_ptr.hbm [resolvable:$true] %s1029
          %1035 = dma.vmem_to_hbm [thread:$0]  %s1028, 1024, %s1030, %s1015, 128, 128, 8
        $region60: #{tpu_custom_call.1} parent=39 // pred_fallthru
          _
      $region40: #{tpu_custom_call.1} parent=5 // pred_fallthru
        _
      %p1036 = scmp.le.s32.totalorder 2, %s19
      // Predicated region
      $region61: #{tpu_custom_call.1} parent=5 // pred_check
        %p1037 = pneg %p1036
      $region62: #{tpu_custom_call.1} parent=5 // pred_check_branch
        %1039 = sbr.rel (%p1037) target = $region64
      $region63: #{tpu_custom_call.1} parent=5 // pred_region
        %s1040 = ssub.s32 %s19, 2
        // Predicated region
        $region65: #{tpu_custom_call.1} parent=63 // pred_check
          %p1041 = pneg %p158
        $region66: #{tpu_custom_call.1} parent=63 // pred_check_branch
          %1043 = sbr.rel (%p1041) target = $region68
        $region67: #{tpu_custom_call.1} parent=63 // pred_region
          %s1044 = sand.u32 %s143, 1
          %s1045 = scalar_lea.sflag [#allocation4], %s1044
          %s1046 = sand.u32 %s143, 1
          %s1047 = smul.addr %s1046, 64
          %s1048 = scalar_lea.vmem [#allocation10], %s1047
          %1050 = dma.done %s1045, 1024
        $region68: #{tpu_custom_call.1} parent=63 // pred_fallthru
          _
      $region64: #{tpu_custom_call.1} parent=5 // pred_fallthru
        _
    $region6: #{tpu_custom_call.1} parent=1 // loop_footer
      %s23 = sadd.s32 1, %s19
    $region7: #{tpu_custom_call.1} parent=1 // loop_footer_branch
      %18 = sbr.rel target = $region3
    $region8: #{tpu_custom_call.1} parent=1 // loop_exit
      _
    %1051 = vsyncpa [#allocation3], 1
    %s1052 = scalar_lea.sflag [#allocation3], 1
    %1053 = vsyncpa %s1052, 1
    %1054 = vsyncpa [#allocation6], 1
    %1055 = vsyncpa [#allocation9], 1
    %1056 = vsyncpa [#allocation4], 1
    %s1057 = scalar_lea.sflag [#allocation4], 1
    %1058 = vsyncpa %s1057, 1

</llo_original>
